<compile_context>
chip_gen: v6e
topology: v6e:2x2x1
jax: 0.10.0
libtpu: 0.0.40
codegen_flags: <defaults>
</compile_context>

<pallas_src>
import jax
import jax.numpy as jnp
from jax import lax
from jax.experimental import pallas as pl
from jax.experimental.pallas import tpu as pltpu


def _round_up(n: int, m: int) -> int:
    return ((n + m - 1) // m) * m


def _detect_buffered() -> bool:
    """Detect once whether pl.BlockSpec(pipeline_mode=pl.Buffered(k)) exists."""
    try:
        pl.BlockSpec((8, 128), lambda i: (i, 0), pipeline_mode=pl.Buffered(1))
        return True
    except Exception:
        return False


_HAS_BUFFERED = _detect_buffered()


def _block_spec(shape, index_map, *, buffers=None):
    if buffers is not None and _HAS_BUFFERED:
        return pl.BlockSpec(shape, index_map, pipeline_mode=pl.Buffered(buffers))
    return pl.BlockSpec(shape, index_map)


def _chip_info():
    """(per-core VMEM capacity bytes, has_two_tensorcores). Conservative fallback."""
    vmem_cap = 64 << 20          # safe on every generation
    two_tc = False
    try:
        info = pltpu.get_tpu_info()
        cap = getattr(info, "vmem_capacity_bytes", None)
        if cap:
            vmem_cap = int(cap)
            # v7x: 64 MiB VMEM per TensorCore and 2 TensorCores per chip.
            two_tc = vmem_cap <= (64 << 20) + (1 << 20)
    except Exception:
        pass
    return vmem_cap, two_tc


def _make_kernel(tn: int, n_col_tiles: int):
    def kernel(x_ref, w_ref, b_ref, o_ref):
        # x_ref: (tm, Hp)    row tile of the input
        # w_ref: (Hp, tn)    weight slab in (in, out) layout -> plain MXU matmul
        # b_ref: (1,  tn)    bias slab
        # o_ref: (tm, tn)    output tile
        x = x_ref[...]
        xm = x if x.dtype == w_ref.dtype else x.astype(w_ref.dtype)
        out = jnp.dot(xm, w_ref[...], preferred_element_type=jnp.float32)  # (tm, tn)
        if n_col_tiles == 1:
            res = x                                   # full row == output cols
        else:
            j = pl.program_id(1)
            start = pl.multiple_of(j * tn, tn)
            res = x_ref[:, pl.ds(start, tn)]          # identity slice of x
        out = out + b_ref[...].astype(jnp.float32) + res.astype(jnp.float32)
        o_ref[...] = jnp.maximum(out, 0.0).astype(o_ref.dtype)   # ReLU on the VPU
    return kernel


def prepare_params(w, b, *, matmul_dtype=None):
    """One-time parameter prep: transpose to (in, out), optional bf16 cast, pad.

    w: (H, H) in PyTorch (out_features, in_features) layout; b: (H,).
    Returns (wt_padded (Hp, Hp), bias_padded (1, Hp)).
    """
    H = w.shape[0]
    assert w.shape == (H, H) and b.shape == (H,)
    Hp = max(128, _round_up(H, 128))
    wt = w.T                                   # (in, out): one-time HBM transpose
    if matmul_dtype is not None:
        wt = wt.astype(matmul_dtype)
    if Hp != H:
        wt = jnp.pad(wt, ((0, Hp - H), (0, Hp - H)))
        b = jnp.pad(b, (0, Hp - H))
    return wt, b.reshape(1, Hp)


def residual_block_apply(x, wt, b2, *, tm=None, vmem_budget=None):
    """y = relu(x @ W^T + b + x) with pre-prepared (transposed/padded) params."""
    B, H = x.shape
    Hp = wt.shape[0]
    assert wt.shape == (Hp, Hp) and b2.shape == (1, Hp) and Hp >= H

    out_dtype = x.dtype
    vmem_cap, two_tc = _chip_info()
    if vmem_budget is None:
        vmem_budget = (vmem_cap * 3) // 4      # ~96 MiB v5e/v6e, ~48 MiB v7x

    w_item = wt.dtype.itemsize
    x_item = x.dtype.itemsize
    o_item = jnp.dtype(out_dtype).itemsize
    sub = 16 if out_dtype == jnp.bfloat16 else 8

    # ---- choose tn (output-dim slab of the (Hp, Hp) weight) ------------------
    w_buf_resident = 1 if _HAS_BUFFERED else 2     # honest accounting on old jax
    resident_bytes = w_buf_resident * Hp * Hp * w_item
    if resident_bytes <= (vmem_budget * 3) // 4:
        tn, n_col = Hp, 1                           # fully resident weight
        w_vmem = resident_bytes
    else:
        # Non-resident: W is re-streamed once per row tile -> prioritize tm.
        wbuf = 3 if _HAS_BUFFERED else 2            # deep-buffer the W slab DMA
        slab_budget = vmem_budget // 4
        m = Hp // 128
        d = 1
        for cand in range(1, m + 1):
            if m % cand == 0 and wbuf * (128 * cand) * Hp * w_item <= slab_budget:
                d = cand
        tn, n_col = 128 * d, Hp // (128 * d)
        w_vmem = wbuf * tn * Hp * w_item

    # ---- choose tm (row tile) -------------------------------------------------
    if tm is None:
        tm = min(512, _round_up(B, sub))
        if two_tc and B >= 2 * sub:
            # v7x only: >=2 row tiles so both TensorCores get work.
            tm = min(tm, _round_up(-(-B // 2), sub))
    tm = max(sub, _round_up(tm, sub))
    avail = vmem_budget - w_vmem
    while tm > sub and 2 * tm * Hp * x_item + 2 * tm * tn * o_item > avail:
        tm = max(sub, _round_up(tm // 2, sub))

    Bp = _round_up(B, tm)
    xp = x if (Bp == B and Hp == H) else jnp.pad(x, ((0, Bp - B), (0, Hp - H)))

    # ---- VMEM limit, clamped below physical capacity --------------------------
    est = (w_vmem + 2 * tm * Hp * x_item + 2 * tm * tn * o_item
           + 3 * 8 * tn * 4)                        # bias slabs (sublane-padded)
    hard_cap = max(vmem_cap - (8 << 20), 32 << 20)
    vmem_limit = int(min(max(est * 3 // 2, 32 << 20), hard_cap))
    vmem_limit = max(vmem_limit, min(est + (2 << 20), hard_cap))

    resident = (n_col == 1)
    grid = (Bp // tm, n_col)

    y = pl.pallas_call(
        _make_kernel(tn, n_col),
        out_shape=jax.ShapeDtypeStruct((Bp, Hp), out_dtype),
        grid_spec=pltpu.PrefetchScalarGridSpec(
            num_scalar_prefetch=0,
            grid=grid,
            in_specs=[
                pl.BlockSpec((tm, Hp), lambda i, j: (i, 0)),               # x rows
                _block_spec((Hp, tn), lambda i, j: (0, j),
                            buffers=1 if resident else 3),                 # W (in,out)
                _block_spec((1, tn), lambda i, j: (0, j),
                            buffers=1 if resident else None),              # bias
            ],
            out_specs=pl.BlockSpec((tm, tn), lambda i, j: (i, j)),
        ),
        compiler_params=pltpu.CompilerParams(
            dimension_semantics=("parallel", "parallel"),
            vmem_limit_bytes=vmem_limit,
        ),
    )(xp, wt, b2)

    return y[:B, :H] if (Bp != B or Hp != H) else y


def residual_block(x, w, b, *, matmul_dtype=None, tm=None, vmem_budget=None):
    """One-shot convenience: y = relu(x @ w.T + b + x) (PyTorch ResidualBlock).

    For repeated calls with the same weights, call prepare_params() once and
    residual_block_apply() in the hot loop to avoid the per-call transpose/cast.
    """
    wt, b2 = prepare_params(w, b, matmul_dtype=matmul_dtype)
    return residual_block_apply(x, wt, b2, tm=tm, vmem_budget=vmem_budget)


if __name__ == "__main__":
    key = jax.random.PRNGKey(0)
    kx, kw, kb, kx2, kw2, kb2 = jax.random.split(key, 6)

    # --- small shapes consistent with ResidualBlock(hidden_size=32) ---------
    batch, hidden = 8, 32
    x = jax.random.normal(kx, (batch, hidden), dtype=jnp.float32)
    w = jax.random.normal(kw, (hidden, hidden), dtype=jnp.float32) * 0.1
    b = jax.random.normal(kb, (hidden,), dtype=jnp.float32) * 0.1

    y = residual_block(x, w, b)
    jax.block_until_ready(y)
    ref = jnp.maximum(x @ w.T + b + x, 0.0)
    assert jnp.allclose(y, ref, atol=1e-5, rtol=1e-5), "f32 mismatch vs reference"

    # --- prepared-params (hot-path) API under jit -----------------------------
    wt_prep, b_prep = prepare_params(w, b)
    y_prep = jax.jit(residual_block_apply)(x, wt_prep, b_prep)
    jax.block_until_ready(y_prep)
    assert jnp.allclose(y_prep, ref, atol=1e-5, rtol=1e-5), "prepared-path mismatch"

    # --- bf16 matmul fast path (f32 accumulate, residual/bias stay f32) -----
    y_bf = residual_block(x, w, b, matmul_dtype=jnp.bfloat16)
    jax.block_until_ready(y_bf)
    ref_bf = jnp.maximum(
        lax.dot_general(x.astype(jnp.bfloat16), w.astype(jnp.bfloat16),
                        (((1,), (1,)), ((), ())),
                        preferred_element_type=jnp.float32) + b + x, 0.0)
    assert jnp.allclose(y_bf, ref_bf.astype(x.dtype), atol=2e-2, rtol=2e-2), \
        "bf16 mismatch vs reference"

    # --- non-aligned shapes: exercises batch/hidden padding ------------------
    B2, H2 = 300, 160
    x2 = jax.random.normal(kx2, (B2, H2), dtype=jnp.float32)
    w2 = jax.random.normal(kw2, (H2, H2), dtype=jnp.float32) * 0.05
    b2 = jax.random.normal(kb2, (H2,), dtype=jnp.float32) * 0.05
    y2 = residual_block(x2, w2, b2)
    jax.block_until_ready(y2)
    ref2 = jnp.maximum(x2 @ w2.T + b2 + x2, 0.0)
    assert jnp.allclose(y2, ref2, atol=1e-4, rtol=1e-4), "padded-case mismatch"

    print("KERNEL_OK")
</pallas_src>

<mosaic_0001>
module attributes {stable_mosaic.version = 11 : i64} {
  func.func @kernel(%arg0: i32, %arg1: i32, %arg2: memref<8x128xf32, #tpu.memory_space<vmem>>, %arg3: memref<128x128xf32, #tpu.memory_space<vmem>>, %arg4: memref<1x128xf32, #tpu.memory_space<vmem>>, %arg5: memref<8x128xf32, #tpu.memory_space<vmem>>) attributes {dimension_semantics = [#tpu.dimension_semantics<parallel>, #tpu.dimension_semantics<parallel>], iteration_bounds = array<i64: 1, 1>, scalar_prefetch = 0 : i64, scratch_operands = 0 : i64, tpu.core_type = #tpu.core_type<tc>, window_params = [{transform_indices = @transform_0, window_bounds = array<i64: 8, 128>}, {pipeline_mode = #tpu.pipeline_mode<synchronous>, transform_indices = @transform_1, window_bounds = array<i64: 128, 128>}, {pipeline_mode = #tpu.pipeline_mode<synchronous>, transform_indices = @transform_2, window_bounds = array<i64: 1, 128>}, {transform_indices = @transform_3, window_bounds = array<i64: 8, 128>}]} {
    %c0 = arith.constant 0 : index
    %c0_0 = arith.constant 0 : index
    %0 = vector.load %arg2[%c0, %c0_0] : memref<8x128xf32, #tpu.memory_space<vmem>>, vector<8x128xf32>
    %c0_1 = arith.constant 0 : index
    %c0_2 = arith.constant 0 : index
    %1 = vector.load %arg3[%c0_1, %c0_2] : memref<128x128xf32, #tpu.memory_space<vmem>>, vector<128x128xf32>
    %cst = arith.constant dense<0.000000e+00> : vector<8x128xf32>
    %2 = tpu.matmul %0, %1, %cst {dimension_numbers = #tpu.dot_dimension_numbers<[1], [0], [0], [1], [0, 0, 1, 1], [], []>} : vector<8x128xf32>, vector<128x128xf32>, vector<8x128xf32> -> vector<8x128xf32>
    %c0_3 = arith.constant 0 : index
    %c0_4 = arith.constant 0 : index
    %3 = vector.load %arg4[%c0_3, %c0_4] : memref<1x128xf32, #tpu.memory_space<vmem>>, vector<1x128xf32>
    %4 = vector.broadcast %3 : vector<1x128xf32> to vector<8x128xf32>
    %5 = arith.addf %2, %4 : vector<8x128xf32>
    %6 = arith.addf %5, %0 : vector<8x128xf32>
    %cst_5 = arith.constant 0.000000e+00 : f32
    %7 = vector.broadcast %cst_5 : f32 to vector<8x128xf32>
    %8 = arith.maximumf %6, %7 : vector<8x128xf32>
    %c0_6 = arith.constant 0 : index
    %c0_7 = arith.constant 0 : index
    %9 = vector.load %arg5[%c0_6, %c0_7] : memref<8x128xf32, #tpu.memory_space<vmem>>, vector<8x128xf32>
    tpu.vector_store %arg5[%c0_6, %c0_7], %8 {strides = array<i32>} : memref<8x128xf32, #tpu.memory_space<vmem>>, vector<8x128xf32>,
    return
  }
  func.func @transform_0(%arg0: i32, %arg1: i32) -> (i32, i32) {
    %c0_i32 = arith.constant 0 : i32
    %c0_i32_0 = arith.constant 0 : i32
    return %arg0, %c0_i32 : i32, i32
  }
  func.func @transform_1(%arg0: i32, %arg1: i32) -> (i32, i32) {
    %c0_i32 = arith.constant 0 : i32
    %c0_i32_0 = arith.constant 0 : i32
    return %c0_i32, %arg1 : i32, i32
  }
  func.func @transform_2(%arg0: i32, %arg1: i32) -> (i32, i32) {
    %c0_i32 = arith.constant 0 : i32
    %c0_i32_0 = arith.constant 0 : i32
    return %c0_i32, %arg1 : i32, i32
  }
  func.func @transform_3(%arg0: i32, %arg1: i32) -> (i32, i32) {
    %c0_i32 = arith.constant 0 : i32
    return %arg0, %arg1 : i32, i32
  }
}

</mosaic_0001>

<llo_original>
// kernel: tpu_custom_call.1
$region0: #{tpu_custom_call.1}
  #allocation0 [shape = 'u32[]', space=smem, size = 0x4, offset = 0x4, fixed_abs, tag = 'smem constant byte address 0x4 - core index']
  #allocation1 [shape = 'u32[144,128]{1,0:T(1,128)}', space=vmem, size = 0x12000, scoped, tag = 'internal scratch']
  %s0 = inlined_call_operand.hbm [shape: f32[8,128], index: 0, kind: input, shape index: {}]
  %s1 = inlined_call_operand.hbm [shape: f32[128,128], index: 1, kind: input, shape index: {}]
  %s2 = inlined_call_operand.vmem [shape: f32[1,128], index: 2, kind: input, shape index: {}]
  %s3 = inlined_call_operand.hbm [shape: f32[8,128], index: 3, kind: output, shape index: {}]
  %s4 = sld [smem:[#allocation0]]
  $region30: #{tpu_custom_call.1} parent=0
    _
  %s6 = ssub.s32 1, %s4
  %s7 = scalar_select 0, %s6, %s4
  $region1: #{tpu_custom_call.1} parent=0
    #allocation2 [shape = 'u8[4096]{0}', space=vmem, size = 0x1000, scoped, tag = 'input window, operand 0, single buffered']
    #allocation3 [shape = 's32[1]{0}', space=sflag, size = 0x4, scoped, tag = 'scoped memory for tpu_custom_call.1']
    #allocation4 [shape = 's32[1]{0}', space=sflag, size = 0x4, scoped, tag = 'scoped memory for tpu_custom_call.1']
    #allocation5 [shape = 'u8[65536]{0}', space=vmem, size = 0x10000, scoped, tag = 'input window, operand 1, single buffered']
    #allocation6 [shape = 's32[1]{0}', space=sflag, size = 0x4, scoped, tag = 'scoped memory for tpu_custom_call.1']
    #allocation7 [shape = 'u8[4096]{0}', space=vmem, size = 0x1000, scoped, tag = 'output window, operand 0, single buffered']
    %8 = vsyncpa [#allocation3], 0
    %9 = vsyncpa [#allocation6], 0
    %10 = vsyncpa [#allocation4], 0
    // Predicated region
    $region2: #{tpu_custom_call.1} parent=1 // pred_check
      _
    $region3: #{tpu_custom_call.1} parent=1 // pred_check_branch
      %12 = sbr.rel (0) target = $region5
    $region4: #{tpu_custom_call.1} parent=1 // pred_region
      %s14 = ssub.s32 128, 128
      %15 = vsyncadd [#allocation3], %s14
      %s17 = sshll.u32 [#allocation2], 4
      %s18 = int_to_ptr.vmem [resolvable:$true] %s17
      %20 = dma.hbm_to_vmem [thread:$0]  %s0, 128, %s18, [#allocation3]
    $region5: #{tpu_custom_call.1} parent=1 // pred_fallthru
      _
    // Predicated region
    $region6: #{tpu_custom_call.1} parent=1 // pred_check
      _
    $region7: #{tpu_custom_call.1} parent=1 // pred_check_branch
      %22 = sbr.rel (0) target = $region9
    $region8: #{tpu_custom_call.1} parent=1 // pred_region
      %s24 = ssub.s32 2048, 2048
      %25 = vsyncadd [#allocation6], %s24
      %s26 = sshll.u32 [#allocation5], 4
      %s27 = int_to_ptr.vmem [resolvable:$true] %s26
      %32 = dma.hbm_to_vmem [thread:$0]  %s1, 2048, %s27, [#allocation6], 128, 128, 8
    $region9: #{tpu_custom_call.1} parent=1 // pred_fallthru
      _
    // Predicated region
    $region10: #{tpu_custom_call.1} parent=1 // pred_check
      _
    $region11: #{tpu_custom_call.1} parent=1 // pred_check_branch
      %34 = sbr.rel (0) target = $region13
    $region12: #{tpu_custom_call.1} parent=1 // pred_region
      _
    $region13: #{tpu_custom_call.1} parent=1 // pred_fallthru
      _
    // Predicated region
    $region14: #{tpu_custom_call.1} parent=1 // pred_check
      _
    $region15: #{tpu_custom_call.1} parent=1 // pred_check_branch
      %36 = sbr.rel (0) target = $region17
    $region16: #{tpu_custom_call.1} parent=1 // pred_region
      %37 = dma.done [#allocation3], 128
    $region17: #{tpu_custom_call.1} parent=1 // pred_fallthru
      _
    // Predicated region
    $region18: #{tpu_custom_call.1} parent=1 // pred_check
      _
    $region19: #{tpu_custom_call.1} parent=1 // pred_check_branch
      %39 = sbr.rel (0) target = $region21
    $region20: #{tpu_custom_call.1} parent=1 // pred_region
      %40 = dma.done [#allocation6], 2048
    $region21: #{tpu_custom_call.1} parent=1 // pred_fallthru
      _
    %v41 = vld [vmem:[#allocation2] sm:$0xff]
    %v42 = vld [vmem:[#allocation5] sm:$0xff]
    %v43 = vld [vmem:[#allocation5 + $0x8] sm:$0xff]
    %v44 = vld [vmem:[#allocation5 + $0x10] sm:$0xff]
    %v45 = vld [vmem:[#allocation5 + $0x18] sm:$0xff]
    %v46 = vld [vmem:[#allocation5 + $0x20] sm:$0xff]
    %v47 = vld [vmem:[#allocation5 + $0x28] sm:$0xff]
    %v48 = vld [vmem:[#allocation5 + $0x30] sm:$0xff]
    %v49 = vld [vmem:[#allocation5 + $0x38] sm:$0xff]
    %v50 = vld [vmem:[#allocation5 + $0x40] sm:$0xff]
    %v51 = vld [vmem:[#allocation5 + $0x48] sm:$0xff]
    %v52 = vld [vmem:[#allocation5 + $0x50] sm:$0xff]
    %v53 = vld [vmem:[#allocation5 + $0x58] sm:$0xff]
    %v54 = vld [vmem:[#allocation5 + $0x60] sm:$0xff]
    %v55 = vld [vmem:[#allocation5 + $0x68] sm:$0xff]
    %v56 = vld [vmem:[#allocation5 + $0x70] sm:$0xff]
    %v57 = vld [vmem:[#allocation5 + $0x78] sm:$0xff]
    %v58 = vld [vmem:[%s2] sm:$0x1]
    %v60 = vlaneseq
    %v61 = vshrl.u32 %v60, 7
    %v62 = vsub.s32 0, %v61
    %v63 = vrot.slane %v58, %v62
    %65 = vmatprep.subr.mxu0 0.0
    %66 = vmatpush1.msra.mxu0 %v57
    %67 = vmatprep.subr.mxu0 0.0
    %68 = vmatpush1.msra.mxu0 %v56
    %69 = vmatprep.subr.mxu0 0.0
    %70 = vmatpush1.msra.mxu0 %v55
    %71 = vmatprep.subr.mxu0 0.0
    %72 = vmatpush1.msra.mxu0 %v54
    %73 = vmatprep.subr.mxu0 0.0
    %74 = vmatpush1.msra.mxu0 %v53
    %75 = vmatprep.subr.mxu0 0.0
    %76 = vmatpush1.msra.mxu0 %v52
    %77 = vmatprep.subr.mxu0 0.0
    %78 = vmatpush1.msra.mxu0 %v51
    %79 = vmatprep.subr.mxu0 0.0
    %80 = vmatpush1.msra.mxu0 %v50
    %81 = vmatprep.subr.mxu0 0.0
    %82 = vmatpush1.msra.mxu0 %v49
    %83 = vmatprep.subr.mxu0 0.0
    %84 = vmatpush1.msra.mxu0 %v48
    %85 = vmatprep.subr.mxu0 0.0
    %86 = vmatpush1.msra.mxu0 %v47
    %87 = vmatprep.subr.mxu0 0.0
    %88 = vmatpush1.msra.mxu0 %v46
    %89 = vmatprep.subr.mxu0 0.0
    %90 = vmatpush1.msra.mxu0 %v45
    %91 = vmatprep.subr.mxu0 0.0
    %92 = vmatpush1.msra.mxu0 %v44
    %93 = vmatprep.subr.mxu0 0.0
    %94 = vmatpush1.msra.mxu0 %v43
    %95 = vmatprep.subr.mxu0 0.0
    %96 = vmatpush1.msra.mxu0 %v42
    %97 = vmatprep.subr.mxu0 0.0
    %98 = vmatpush2.msra.mxu0 0.0
    %99 = vmatprep.subr.mxu0 0.0
    %100 = vmatpush2.msra.mxu0 0.0
    %101 = vmatprep.subr.mxu0 0.0
    %102 = vmatpush2.msra.mxu0 0.0
    %103 = vmatprep.subr.mxu0 0.0
    %104 = vmatpush2.msra.mxu0 0.0
    %105 = vmatprep.subr.mxu0 0.0
    %106 = vmatpush2.msra.mxu0 0.0
    %107 = vmatprep.subr.mxu0 0.0
    %108 = vmatpush2.msra.mxu0 0.0
    %109 = vmatprep.subr.mxu0 0.0
    %110 = vmatpush2.msra.mxu0 0.0
    %111 = vmatprep.subr.mxu0 0.0
    %112 = vmatpush2.msra.mxu0 0.0
    %113 = vmatprep.subr.mxu0 0.0
    %114 = vmatpush2.msra.mxu0 0.0
    %115 = vmatprep.subr.mxu0 0.0
    %116 = vmatpush2.msra.mxu0 0.0
    %117 = vmatprep.subr.mxu0 0.0
    %118 = vmatpush2.msra.mxu0 0.0
    %119 = vmatprep.subr.mxu0 0.0
    %120 = vmatpush2.msra.mxu0 0.0
    %121 = vmatprep.subr.mxu0 0.0
    %122 = vmatpush2.msra.mxu0 0.0
    %123 = vmatprep.subr.mxu0 0.0
    %124 = vmatpush2.msra.mxu0 0.0
    %125 = vmatprep.subr.mxu0 0.0
    %126 = vmatpush2.msra.mxu0 0.0
    %127 = vmatprep.subr.mxu0 0.0
    %128 = vmatpush2.msra.mxu0 0.0
    %129 = vmatprep.mubr.f32.mxu0 0.0
    %130 = vmatmul.mubr.f32.gmra.mxu0 %v41
    %v131 = vpop.f32.mrf.mxu0
    %v132 = vadd.f32 %v63, %v131
    %v133 = vpop.f32.mrf.mxu0
    %134 = vdwg.mxu0
    %v135 = vadd.f32 %v132, %v41
    %v136 = vmax.f32 %v135, 0.0
    %137 = vst [vmem:[#allocation7] sm:$0xff] %v136
    // Predicated region
    $region22: #{tpu_custom_call.1} parent=1 // pred_check
      _
    $region23: #{tpu_custom_call.1} parent=1 // pred_check_branch
      %139 = sbr.rel (0) target = $region25
    $region24: #{tpu_custom_call.1} parent=1 // pred_region
      %s141 = ssub.s32 128, 128
      %142 = vsyncadd [#allocation4], %s141
      %s144 = sshll.u32 [#allocation7], 4
      %s145 = int_to_ptr.vmem [resolvable:$true] %s144
      %147 = dma.vmem_to_hbm [thread:$0]  %s145, 128, %s3, [#allocation4]
    $region25: #{tpu_custom_call.1} parent=1 // pred_fallthru
      _
    // Predicated region
    $region26: #{tpu_custom_call.1} parent=1 // pred_check
      _
    $region27: #{tpu_custom_call.1} parent=1 // pred_check_branch
      %149 = sbr.rel (0) target = $region29
    $region28: #{tpu_custom_call.1} parent=1 // pred_region
      %150 = dma.done [#allocation4], 128
    $region29: #{tpu_custom_call.1} parent=1 // pred_fallthru
      _
    %151 = vsyncpa [#allocation3], 1
    %152 = vsyncpa [#allocation6], 1
    %153 = vsyncpa [#allocation4], 1

</llo_original>
